<compile_context>
chip_gen: v7x
topology: tpu7x:2x2x1
jax: 0.10.0
libtpu: 0.0.40
codegen_flags: <defaults>
</compile_context>

<pallas_src>
import jax
import jax.numpy as jnp
from jax.experimental import pallas as pl
from jax.experimental.pallas import tpu as pltpu

_F32_BYTES = 4
_DEFAULT_TM = 1024          # batch tile (rows per grid step)
_DEFAULT_TK = 1024          # K tile for the large-L accumulator path
_VMEM_LIMIT = 32 * 1024 * 1024
_VMEM_BUDGET = 28 * 1024 * 1024   # switch to K-tiling above this estimate


def _round_up(n, m):
    return ((n + m - 1) // m) * m


# ---------------------------------------------------------------------------
# Kernels
# ---------------------------------------------------------------------------
def _linear_kernel(x_ref, w_ref, b_ref, o_ref):
    # x_ref: (tm, L), w_ref: (L, C), b_ref: (1, C), o_ref: (tm, C)
    y = jnp.dot(x_ref[...], w_ref[...], preferred_element_type=jnp.float32)
    o_ref[...] = (y + b_ref[...]).astype(o_ref.dtype)


def _linear_ktiled_kernel(x_ref, w_ref, b_ref, o_ref, acc_ref):
    # Grid: (batch tiles, K tiles). Output block is revisited across K (P3).
    @pl.when(pl.program_id(1) == 0)
    def _():
        acc_ref[...] = jnp.zeros_like(acc_ref)

    acc_ref[...] += jnp.dot(x_ref[...], w_ref[...],
                            preferred_element_type=jnp.float32)

    @pl.when(pl.program_id(1) == pl.num_programs(1) - 1)
    def _():
        o_ref[...] = (acc_ref[...] + b_ref[...]).astype(o_ref.dtype)


# ---------------------------------------------------------------------------
# Pallas wrapper:  y = x @ w + b   (x: (B, L), w: (L, C), b2d: (1, C))
# ---------------------------------------------------------------------------
def _pallas_linear(x, w, b2d, *, tm=_DEFAULT_TM, tk=_DEFAULT_TK):
    B, L = x.shape
    L_w, C = w.shape
    assert L == L_w and b2d.shape == (1, C)

    tm = min(tm, B)  # block == full batch dim when B is small (legal block dim)

    # Resident-weight footprint estimate (double-buffered x/out stream + w + b).
    est = (2 * tm * L + 2 * (L * C + C) + 2 * tm * C) * _F32_BYTES

    if est <= _VMEM_BUDGET:
        # ---- Path A: weight/bias pinned VMEM-resident, stream batch tiles ----
        out = pl.pallas_call(
            _linear_kernel,
            out_shape=jax.ShapeDtypeStruct((B, C), jnp.float32),
            grid=(pl.cdiv(B, tm),),
            in_specs=[
                pl.BlockSpec((tm, L), lambda i: (i, 0)),   # activation stream
                pl.BlockSpec((L, C), lambda i: (0, 0)),    # weight (resident)
                pl.BlockSpec((1, C), lambda i: (0, 0)),    # bias   (resident)
            ],
            out_specs=pl.BlockSpec((tm, C), lambda i: (i, 0)),  # natural width
            compiler_params=pltpu.CompilerParams(
                dimension_semantics=("parallel",),
                vmem_limit_bytes=_VMEM_LIMIT,
            ),
        )(x, w, b2d)
        return out

    # ---- Path B: large L -> K-tiled accumulator (bounded VMEM on v5e/v7x) ----
    L_pad = _round_up(L, tk)
    if L_pad != L:
        # Zero-pad K on both operands so the last K tile contributes exactly 0.
        x = jnp.pad(x, ((0, 0), (0, L_pad - L)))
        w = jnp.pad(w, ((0, L_pad - L), (0, 0)))

    out = pl.pallas_call(
        _linear_ktiled_kernel,
        out_shape=jax.ShapeDtypeStruct((B, C), jnp.float32),
        grid=(pl.cdiv(B, tm), L_pad // tk),
        in_specs=[
            pl.BlockSpec((tm, tk), lambda i, k: (i, k)),
            pl.BlockSpec((tk, C), lambda i, k: (k, 0)),
            pl.BlockSpec((1, C), lambda i, k: (0, 0)),
        ],
        out_specs=pl.BlockSpec((tm, C), lambda i, k: (i, 0)),
        scratch_shapes=[pltpu.VMEM((tm, C), jnp.float32)],
        compiler_params=pltpu.CompilerParams(
            dimension_semantics=("parallel", "arbitrary"),
            vmem_limit_bytes=_VMEM_LIMIT,
        ),
    )(x, w, b2d)
    return out


# Whole forward under ONE jit: flatten + cast + pallas matmul, single dispatch.
@jax.jit
def _forward_jit(x, w_eff, b2d):
    B = x.shape[0]
    xf = x.reshape(B, -1).astype(w_eff.dtype)   # flatten like x.view(B, -1)
    # Dropout(0.1) -> identity at inference.
    return _pallas_linear(xf, w_eff, b2d)


# ---------------------------------------------------------------------------
# Model
# ---------------------------------------------------------------------------
def _adaptive_pool_matrix(L, output_size):
    """(L, output_size) matrix P with x @ P == F.adaptive_avg_pool1d(x, output_size).

    Torch window rule: start = floor(i*L/out), end = ceil((i+1)*L/out).
    Built once per distinct L (host side), then folded into the Linear weight.
    """
    cols = []
    for i in range(output_size):
        start = (i * L) // output_size
        end = -(-((i + 1) * L) // output_size)  # ceil
        col = jnp.zeros((L,), jnp.float32).at[start:end].set(1.0 / (end - start))
        cols.append(col)
    return jnp.stack(cols, axis=1)


class SimpleDummyModelJAX:
    """flatten -> [adaptive_avg_pool1d if needed] -> dropout(eval) -> Linear,
    collapsed into a single Pallas matmul.

    compute_dtype=jnp.bfloat16 halves the dominant HBM streams (accumulation
    stays f32) at the cost of looser numerics; default is float32.
    """

    def __init__(self, input_size=32, num_classes=10, seed=0,
                 compute_dtype=jnp.float32):
        self.input_size = input_size
        self.num_classes = num_classes
        self.compute_dtype = compute_dtype
        kw, kb = jax.random.split(jax.random.PRNGKey(seed))
        # Deterministic init mimicking nn.Linear's uniform(-1/sqrt(in), 1/sqrt(in)).
        bound = 1.0 / (input_size ** 0.5)
        # Stored pre-transposed: (F, C) so y = x @ W + b.
        self.w = jax.random.uniform(
            kw, (input_size, num_classes), dtype=jnp.float32,
            minval=-bound, maxval=bound)
        self.b = jax.random.uniform(
            kb, (num_classes,), dtype=jnp.float32, minval=-bound, maxval=bound)
        self._b2d = self.b.reshape(1, num_classes)
        # Cache of effective weights keyed by flattened feature length L.
        self._w_eff_cache = {}

    def _effective_weight(self, L):
        w_eff = self._w_eff_cache.get(L)
        if w_eff is None:
            if L == self.input_size:
                w_eff = self.w
            else:
                # adaptive_avg_pool1d is linear -> fold: (x @ P) @ W == x @ (P @ W)
                w_eff = _adaptive_pool_matrix(L, self.input_size) @ self.w
            w_eff = w_eff.astype(self.compute_dtype)
            self._w_eff_cache[L] = w_eff
        return w_eff

    def __call__(self, x):
        L = 1
        for d in x.shape[1:]:
            L *= int(d)
        w_eff = self._effective_weight(L)     # pooling (if any) already folded in
        return _forward_jit(x, w_eff, self._b2d)


if __name__ == "__main__":
    model = SimpleDummyModelJAX(input_size=32, num_classes=10, seed=0)

    key = jax.random.PRNGKey(0)
    k1, k2, k3 = jax.random.split(key, 3)

    # Case 1: flattened size == 32 -> no pooling path.
    x1 = jax.random.normal(k1, (2, 32), dtype=jnp.float32)
    y1 = model(x1)
    jax.block_until_ready(y1)
    assert y1.shape == (2, 10)
    ref1 = x1 @ model.w + model.b
    assert jnp.allclose(y1, ref1, atol=1e-5, rtol=1e-5), "no-pool path mismatch"

    # Case 2: flattens to (2, 64) != 32 -> pooling folded into the weight.
    x2 = jax.random.normal(k2, (2, 4, 16), dtype=jnp.float32)
    y2 = model(x2)
    jax.block_until_ready(y2)
    assert y2.shape == (2, 10)
    # Reference: explicit adaptive_avg_pool1d (torch window rule on the flattened
    # (B, 1, L) vector) followed by the Linear layer.
    x2f = x2.reshape(2, -1)
    L = x2f.shape[1]
    pooled_cols = []
    for i in range(32):
        start = (i * L) // 32
        end = -(-((i + 1) * L) // 32)
        pooled_cols.append(jnp.mean(x2f[:, start:end], axis=1))
    pooled = jnp.stack(pooled_cols, axis=1)
    ref2 = pooled @ model.w + model.b
    assert jnp.allclose(y2, ref2, atol=1e-4, rtol=1e-4), "pooled path mismatch"

    # Case 3: batch not a multiple of 8 (full-dim block path, no padding).
    x3 = jax.random.normal(k3, (5, 32), dtype=jnp.float32)
    y3 = model(x3)
    jax.block_until_ready(y3)
    assert y3.shape == (5, 10)
    ref3 = x3 @ model.w + model.b
    assert jnp.allclose(y3, ref3, atol=1e-5, rtol=1e-5), "odd-batch path mismatch"

    print("KERNEL_OK")
</pallas_src>

<mosaic_0001>
module attributes {stable_mosaic.version = 11 : i64} {
  func.func @_linear_kernel(%arg0: i32, %arg1: memref<2x32xf32, #tpu.memory_space<vmem>>, %arg2: memref<32x10xf32, #tpu.memory_space<vmem>>, %arg3: memref<1x10xf32, #tpu.memory_space<vmem>>, %arg4: memref<2x10xf32, #tpu.memory_space<vmem>>) attributes {dimension_semantics = [#tpu.dimension_semantics<parallel>], iteration_bounds = array<i64: 1>, scalar_prefetch = 0 : i64, scratch_operands = 0 : i64, tpu.core_type = #tpu.core_type<tc>, window_params = [{transform_indices = @transform_0, window_bounds = array<i64: 2, 32>}, {pipeline_mode = #tpu.pipeline_mode<synchronous>, transform_indices = @transform_1, window_bounds = array<i64: 32, 10>}, {pipeline_mode = #tpu.pipeline_mode<synchronous>, transform_indices = @transform_2, window_bounds = array<i64: 1, 10>}, {transform_indices = @transform_3, window_bounds = array<i64: 2, 10>}]} {
    %c0 = arith.constant 0 : index
    %c0_0 = arith.constant 0 : index
    %0 = vector.load %arg1[%c0, %c0_0] : memref<2x32xf32, #tpu.memory_space<vmem>>, vector<2x32xf32>
    %c0_1 = arith.constant 0 : index
    %c0_2 = arith.constant 0 : index
    %1 = vector.load %arg2[%c0_1, %c0_2] : memref<32x10xf32, #tpu.memory_space<vmem>>, vector<32x10xf32>
    %cst = arith.constant dense<0.000000e+00> : vector<2x10xf32>
    %2 = tpu.matmul %0, %1, %cst {dimension_numbers = #tpu.dot_dimension_numbers<[1], [0], [0], [1], [0, 0, 1, 1], [], []>} : vector<2x32xf32>, vector<32x10xf32>, vector<2x10xf32> -> vector<2x10xf32>
    %c0_3 = arith.constant 0 : index
    %c0_4 = arith.constant 0 : index
    %3 = vector.load %arg3[%c0_3, %c0_4] : memref<1x10xf32, #tpu.memory_space<vmem>>, vector<1x10xf32>
    %4 = vector.broadcast %3 : vector<1x10xf32> to vector<2x10xf32>
    %5 = arith.addf %2, %4 : vector<2x10xf32>
    %c0_5 = arith.constant 0 : index
    %c0_6 = arith.constant 0 : index
    %6 = vector.load %arg4[%c0_5, %c0_6] : memref<2x10xf32, #tpu.memory_space<vmem>>, vector<2x10xf32>
    tpu.vector_store %arg4[%c0_5, %c0_6], %5 {strides = array<i32>} : memref<2x10xf32, #tpu.memory_space<vmem>>, vector<2x10xf32>,
    return
  }
  func.func @transform_0(%arg0: i32) -> (i32, i32) {
    %c0_i32 = arith.constant 0 : i32
    %c0_i32_0 = arith.constant 0 : i32
    return %arg0, %c0_i32 : i32, i32
  }
  func.func @transform_1(%arg0: i32) -> (i32, i32) {
    %c0_i32 = arith.constant 0 : i32
    %c0_i32_0 = arith.constant 0 : i32
    %c0_i32_1 = arith.constant 0 : i32
    return %c0_i32, %c0_i32_0 : i32, i32
  }
  func.func @transform_2(%arg0: i32) -> (i32, i32) {
    %c0_i32 = arith.constant 0 : i32
    %c0_i32_0 = arith.constant 0 : i32
    %c0_i32_1 = arith.constant 0 : i32
    return %c0_i32, %c0_i32_0 : i32, i32
  }
  func.func @transform_3(%arg0: i32) -> (i32, i32) {
    %c0_i32 = arith.constant 0 : i32
    %c0_i32_0 = arith.constant 0 : i32
    return %arg0, %c0_i32 : i32, i32
  }
}

</mosaic_0001>

<llo_original>
// kernel: _forward_jit.1
$region0: #{_forward_jit.1}
  #allocation0 [shape = 'u32[]', space=smem, size = 0x4, offset = 0x4, fixed_abs, tag = 'smem constant byte address 0x4 - core index']
  #allocation1 [shape = 'u32[144,128]{1,0:T(1,128)}', space=vmem, size = 0x12000, scoped, tag = 'internal scratch']
  %s0 = inlined_call_operand.vmem [shape: f32[2,32], index: 0, kind: input, shape index: {}]
  %s1 = inlined_call_operand.vmem [shape: f32[32,10], index: 1, kind: input, shape index: {}]
  %s2 = inlined_call_operand.vmem [shape: f32[1,10], index: 2, kind: input, shape index: {}]
  %s3 = inlined_call_operand.hbm [shape: f32[2,10], index: 3, kind: output, shape index: {}]
  %s4 = sld [smem:[#allocation0]]
  $region22: #{_forward_jit.1} parent=0
    _
  %s6 = ssub.s32 1, %s4
  %s7 = scalar_select 0, %s6, %s4
  $region1: #{_forward_jit.1} parent=0
    #allocation2 [shape = 'u8[1024]{0}', space=vmem, size = 0x400, scoped, tag = 'output window, operand 0, single buffered']
    #allocation3 [shape = 's32[1]{0}', space=sflag, size = 0x4, scoped, tag = 'scoped memory for _forward_jit.1']
    %8 = vsyncpa [#allocation3], 0
    // Predicated region
    $region2: #{_forward_jit.1} parent=1 // pred_check
      _
    $region3: #{_forward_jit.1} parent=1 // pred_check_branch
      %10 = sbr.rel (0) target = $region5
    $region4: #{_forward_jit.1} parent=1 // pred_region
      _
    $region5: #{_forward_jit.1} parent=1 // pred_fallthru
      _
    // Predicated region
    $region6: #{_forward_jit.1} parent=1 // pred_check
      _
    $region7: #{_forward_jit.1} parent=1 // pred_check_branch
      %12 = sbr.rel (0) target = $region9
    $region8: #{_forward_jit.1} parent=1 // pred_region
      _
    $region9: #{_forward_jit.1} parent=1 // pred_fallthru
      _
    // Predicated region
    $region10: #{_forward_jit.1} parent=1 // pred_check
      _
    $region11: #{_forward_jit.1} parent=1 // pred_check_branch
      %14 = sbr.rel (0) target = $region13
    $region12: #{_forward_jit.1} parent=1 // pred_region
      _
    $region13: #{_forward_jit.1} parent=1 // pred_fallthru
      _
    %v15 = vld [vmem:[%s0] sm:$0x3]
    %v16 = vld [vmem:[%s1] sm:$0xff]
    %v17 = vld [vmem:[%s1 + $0x8] sm:$0xff]
    %v18 = vld [vmem:[%s1 + $0x10] sm:$0xff]
    %v19 = vld [vmem:[%s1 + $0x18] sm:$0xff]
    %v20 = vld [vmem:[%s2] sm:$0x1]
    %v22 = vlaneseq
    %v23 = vshrl.u32 %v22, 7
    %v24 = vsub.s32 0, %v23
    %v25 = vrot.slane %v20, %v24
    %vm27 = vcmask 261120
    %v29 = vsel %vm27, %v15, 0
    %31 = vmatprep.subr.mxu0 0.0
    %32 = vmatpush1.msra.mxu0 %v16
    %33 = vmatprep.subr.mxu0 0.0
    %34 = vmatpush1.msra.mxu0 %v17
    %35 = vmatprep.subr.mxu0 0.0
    %36 = vmatpush1.msra.mxu0 %v18
    %37 = vmatprep.subr.mxu0 0.0
    %38 = vmatpush1.msra.mxu0 %v19
    %39 = vmatprep.subr.mxu0 0.0
    %40 = vmatpush1.msra.mxu0 0.0
    %41 = vmatprep.subr.mxu0 0.0
    %42 = vmatpush1.msra.mxu0 0.0
    %43 = vmatprep.subr.mxu0 0.0
    %44 = vmatpush1.msra.mxu0 0.0
    %45 = vmatprep.subr.mxu0 0.0
    %46 = vmatpush1.msra.mxu0 0.0
    %47 = vmatprep.subr.mxu0 0.0
    %48 = vmatpush1.msra.mxu0 0.0
    %49 = vmatprep.subr.mxu0 0.0
    %50 = vmatpush1.msra.mxu0 0.0
    %51 = vmatprep.subr.mxu0 0.0
    %52 = vmatpush1.msra.mxu0 0.0
    %53 = vmatprep.subr.mxu0 0.0
    %54 = vmatpush1.msra.mxu0 0.0
    %55 = vmatprep.subr.mxu0 0.0
    %56 = vmatpush1.msra.mxu0 0.0
    %57 = vmatprep.subr.mxu0 0.0
    %58 = vmatpush1.msra.mxu0 0.0
    %59 = vmatprep.subr.mxu0 0.0
    %60 = vmatpush1.msra.mxu0 0.0
    %61 = vmatprep.subr.mxu0 0.0
    %62 = vmatpush1.msra.mxu0 0.0
    %63 = vmatprep.subr.mxu0 0.0
    %64 = vmatpush1.msra.mxu0 0.0
    %65 = vmatprep.subr.mxu0 0.0
    %66 = vmatpush1.msra.mxu0 0.0
    %67 = vmatprep.subr.mxu0 0.0
    %68 = vmatpush1.msra.mxu0 0.0
    %69 = vmatprep.subr.mxu0 0.0
    %70 = vmatpush1.msra.mxu0 0.0
    %71 = vmatprep.subr.mxu0 0.0
    %72 = vmatpush1.msra.mxu0 0.0
    %73 = vmatprep.subr.mxu0 0.0
    %74 = vmatpush1.msra.mxu0 0.0
    %75 = vmatprep.subr.mxu0 0.0
    %76 = vmatpush1.msra.mxu0 0.0
    %77 = vmatprep.subr.mxu0 0.0
    %78 = vmatpush1.msra.mxu0 0.0
    %79 = vmatprep.subr.mxu0 0.0
    %80 = vmatpush1.msra.mxu0 0.0
    %81 = vmatprep.subr.mxu0 0.0
    %82 = vmatpush1.msra.mxu0 0.0
    %83 = vmatprep.subr.mxu0 0.0
    %84 = vmatpush1.msra.mxu0 0.0
    %85 = vmatprep.subr.mxu0 0.0
    %86 = vmatpush1.msra.mxu0 0.0
    %87 = vmatprep.subr.mxu0 0.0
    %88 = vmatpush1.msra.mxu0 0.0
    %89 = vmatprep.subr.mxu0 0.0
    %90 = vmatpush1.msra.mxu0 0.0
    %91 = vmatprep.subr.mxu0 0.0
    %92 = vmatpush1.msra.mxu0 0.0
    %93 = vmatprep.subr.mxu0 0.0
    %94 = vmatpush1.msra.mxu0 0.0
    %95 = vmatprep.mubr.f32.mxu0 0.0
    %96 = vmatmul.mubr.f32.gmra.mrb[0].mxu0 %v29
    %v97 = vpop.f32.mrb[0].mxu0
    %v98 = vadd.f32 %v25, %v97
    %v99 = vpop.f32.mrb[0].mxu0
    %100 = vdwg.mxu0
    %vm101 = vcmask 74752
    %102 = vst.msk [vmem:[#allocation2] sm:$0x3] %vm101, %v98
    // Predicated region
    $region14: #{_forward_jit.1} parent=1 // pred_check
      _
    $region15: #{_forward_jit.1} parent=1 // pred_check_branch
      %104 = sbr.rel (0) target = $region17
    $region16: #{_forward_jit.1} parent=1 // pred_region
      %s106 = ssub.s32 32, 32
      %107 = vsyncadd [#allocation3], %s106
      %s109 = sshll.u32 [#allocation2], 4
      %s110 = int_to_ptr.vmem [resolvable:$true] %s109
      %112 = dma.vmem_to_hbm [thread:$0]  %s110, 32, %s3, [#allocation3]
    $region17: #{_forward_jit.1} parent=1 // pred_fallthru
      _
    // Predicated region
    $region18: #{_forward_jit.1} parent=1 // pred_check
      _
    $region19: #{_forward_jit.1} parent=1 // pred_check_branch
      %114 = sbr.rel (0) target = $region21
    $region20: #{_forward_jit.1} parent=1 // pred_region
      %115 = dma.done [#allocation3], 32
    $region21: #{_forward_jit.1} parent=1 // pred_fallthru
      _
    %116 = vsyncpa [#allocation3], 1

</llo_original>
